<compile_context>
chip_gen: v5e
topology: v5e:2x2
jax: 0.10.0
libtpu: 0.0.40
codegen_flags: <defaults>
</compile_context>

<pallas_src>
import numpy as np
import jax
import jax.numpy as jnp
from jax.experimental import pallas as pl
from jax.experimental.pallas import tpu as pltpu

_BUCKET = 128          # fixed row bucket (multiple of 128) -> lane-dense, few shapes


def _bucket(n, mult=_BUCKET):
    return max(mult, ((int(n) + mult - 1) // mult) * mult)


# ----------------------------------------------------------------------------- #
# Fused Pallas kernel: weighted softplus-margin CE + smooth-L1, scalar out
# ----------------------------------------------------------------------------- #
def _loss_kernel(cls_ref, reg_ref, tgt_ref, out_ref):
    """out[0,0] = sum(cw * CE_cols) + sum(rw * smoothL1_cols)   (3x already in rw).

    cls_ref (8, MC): rows [l0, l1, sign, cw, 0, 0, 0, 0]
    reg_ref (8, MR): rows [pred0..6, rw]
    tgt_ref (8, MR): rows [tgt0..6,  rw]   (so row-7 difference is exactly 0)
    Padding columns have weight 0 and are masked with where(), so they add 0.
    """
    # ---------------- classification: softplus of margin ----------------------
    c = cls_ref[...]
    x = c[2:3, :] * (c[1:2, :] - c[0:1, :])          # sign * (l1 - l0) = l_other - l_target
    ce = jnp.maximum(x, 0.0) + jnp.log(1.0 + jnp.exp(-jnp.abs(x)))
    cw = c[3:4, :]
    class_sum = jnp.sum(jnp.where(cw > 0.0, cw * ce, 0.0))

    # ---------------- regression: smooth-L1 on precomputed targets ------------
    d = reg_ref[...] - tgt_ref[...]                  # (8, MR); row 7 is identically 0
    ad = jnp.abs(d)
    sl1 = jnp.where(ad < 1.0, 0.5 * d * d, ad - 0.5)
    col = jnp.sum(sl1, axis=0, keepdims=True)        # (1, MR) per-column 7-elem sum
    rw = reg_ref[7:8, :]
    reg_sum = jnp.sum(jnp.where(rw > 0.0, rw * col, 0.0))

    out_ref[0, 0] = class_sum + reg_sum


@jax.jit
def _device_loss(cls_feat, reg_feat, ce_idx, cls_host_rows, pred_idx, rw_row, tgt_tile):
    """Batched gathers + 8-sublane packing + the fused Pallas reduction, one jit."""
    cls_flat = jnp.reshape(cls_feat, (-1,))
    reg_flat = jnp.reshape(reg_feat, (-1,))
    # cast AFTER the gather: only the tiny gathered slabs are converted
    logits = jnp.take(cls_flat, ce_idx, axis=0).astype(jnp.float32)     # (2, MC)
    pred = jnp.take(reg_flat, pred_idx, axis=0).astype(jnp.float32)     # (7, MR)
    cls_tile = jnp.concatenate([logits, cls_host_rows], axis=0)         # (8, MC)
    reg_tile = jnp.concatenate([pred, rw_row], axis=0)                  # (8, MR)
    out = pl.pallas_call(
        _loss_kernel,
        out_shape=jax.ShapeDtypeStruct((1, 1), jnp.float32),
        in_specs=[pl.BlockSpec(memory_space=pltpu.MemorySpace.VMEM)] * 3,
        out_specs=pl.BlockSpec(memory_space=pltpu.MemorySpace.SMEM),
    )(cls_tile, reg_tile, tgt_tile)
    return jnp.reshape(out[0, 0], (1,))


# ----------------------------------------------------------------------------- #
# Host-side glue (mirrors the reference python/numpy logic, deterministic RNG)
# ----------------------------------------------------------------------------- #
def get_anchor_bbox_feature():
    f = int(700 / 4)
    width, length, height = 2.0, 4.0, 1.5
    anc_x = np.matmul(np.linspace(0.0, 70.0, f, dtype=np.float32).reshape(f, 1),
                      np.ones((1, f), np.float32))[None]
    anc_y = np.matmul(np.ones((f, 1), np.float32),
                      np.linspace(-35.0, 35.0, f, dtype=np.float32).reshape(1, f))[None]
    anc_z = np.full((1, f, f), -4.5, np.float32)
    anc_w = np.full((1, f, f), width, np.float32)
    anc_l = np.full((1, f, f), length, np.float32)
    anc_h = np.full((1, f, f), height, np.float32)
    anc_o1 = np.zeros((1, f, f), np.float32)
    anc_o2 = np.full((1, f, f), 3.1415926 / 2, np.float32)
    s1 = np.concatenate([anc_x, anc_y, anc_z, anc_l, anc_w, anc_h, anc_o1], 0)[None]
    s2 = np.concatenate([anc_x, anc_y, anc_z, anc_l, anc_w, anc_h, anc_o2], 0)[None]
    return np.concatenate([s1, s2], 0)        # (2, 7, 175, 175)


def get_positions_positive(H, W, ref_bboxes, regress_type, rng, sample_threshold=128):
    positive_position_list = []
    positive_position_regress = []
    positive_position_idx = {}
    temp_cnt = 0
    for i, ref_bbox in enumerate(ref_bboxes):
        positive_position_idx[i] = []
        point_x = int(ref_bbox[0] * 10 / 4)
        point_y = int((ref_bbox[1] * 10 + 350) / 4)
        if point_x < 0 or point_x > H - 1 or point_y < 0 or point_y > W - 1:
            continue
        for x_int in range(3):
            pos_x = point_x - 1 + x_int
            for y_int in range(3):
                pos_y = point_y - 1 + y_int
                if pos_x < 0 or pos_x > H - 1 or pos_y < 0 or pos_y > W - 1:
                    continue
                positive_position_list.append([pos_x, pos_y])
                if regress_type == 0:
                    positive_position_regress.append([pos_x, pos_y])
                    positive_position_idx[i].append(temp_cnt)
                    temp_cnt += 1
                elif x_int == 1 and y_int == 1:
                    positive_position_regress.append([pos_x, pos_y])
                    positive_position_idx[i].append(temp_cnt)
                    temp_cnt += 1
    perm = rng.permutation(len(positive_position_list))
    positive_position_list = [positive_position_list[p] for p in perm]
    if len(positive_position_list) > sample_threshold:
        positive_position_list = positive_position_list[:sample_threshold]
    return positive_position_idx, np.array(positive_position_regress), positive_position_list


def get_positions_negative(H, W, positive_position_list, rng, sample_threshold=128):
    # TODO(synk): rejection-sampling while-loop with host RNG has no Pallas
    # equivalent; kept on host (matches the reference semantics, deterministic seed).
    negative_position_list = []
    sample = 0
    while True:
        x = int(rng.randint(H))
        y = int(rng.randint(W))
        if [x, y] in positive_position_list:
            continue
        negative_position_list.append([x, y])
        sample += 1
        if sample > sample_threshold:
            break
    return negative_position_list


def loss_total_forward(reference_bboxes_batch, num_ref_bbox_batch,
                       predicted_class_feature_batch, predicted_regress_feature_batch,
                       pred_bbox_f, anchor_set, regress_type=0, seed=0):
    """JAX/Pallas equivalent of LossTotal.forward. Returns shape (1,) float32.

    Note: pred_bbox_f is accepted for signature fidelity but (as in the reference,
    where `bbox_real` is never used) it does not affect the loss.
    """
    del pred_bbox_f
    rng = np.random.RandomState(seed)
    ref_np = np.asarray(jax.device_get(reference_bboxes_batch), dtype=np.float32)
    num_np = np.asarray(jax.device_get(num_ref_bbox_batch))
    anchor_np = np.asarray(anchor_set, dtype=np.float32)          # (2, 7, H, W)
    B = ref_np.shape[0]
    H, W = anchor_np.shape[2], anchor_np.shape[3]
    HW = H * W
    ch_reg = np.arange(14, dtype=np.int64).reshape(1, 2, 7)       # regress-channel map

    ce_i0, ce_i1, ce_sg, ce_wt = [], [], [], []
    rg_idx, rg_tgt, rg_wt = [], [], []

    for b in range(B):
        ref_boxes = ref_np[b, :int(num_np[b])]
        IDX, pos_regress, pos_list = get_positions_positive(H, W, ref_boxes, regress_type, rng)
        neg_list = get_positions_negative(H, W, pos_list, rng)
        pos_arr = np.array(pos_list, dtype=np.int64).reshape(-1, 2)
        neg_arr = np.array(neg_list, dtype=np.int64).reshape(-1, 2)
        flat_pos = pos_arr[:, 0] * W + pos_arr[:, 1]
        flat_neg = neg_arr[:, 0] * W + neg_arr[:, 1]
        cls_base = b * 4 * HW
        reg_base = b * 14 * HW

        # ---- classification rows: channel pairs [0:2] and [2:4] --------------
        for s in (0, 1):
            c0 = cls_base + (2 * s) * HW
            c1 = cls_base + (2 * s + 1) * HW
            P = flat_pos.shape[0]
            if P > 0:
                ce_i0.append(c0 + flat_pos)
                ce_i1.append(c1 + flat_pos)
                ce_sg.append(np.full(P, -1.0, np.float32))        # label 1 -> sign -1
                ce_wt.append(np.full(P, 1.0 / P, np.float32))     # group mean
            Nn = flat_neg.shape[0]
            ce_i0.append(c0 + flat_neg)
            ce_i1.append(c1 + flat_neg)
            ce_sg.append(np.ones(Nn, np.float32))                 # label 0 -> sign +1
            ce_wt.append(np.full(Nn, 1.0 / Nn, np.float32))

        # ---- regression rows: one row per (position, anchor) pair ------------
        for idx, ref_box in enumerate(ref_boxes):
            ids = IDX.get(idx, [])
            if len(ids) == 0:
                continue
            pts = np.asarray(pos_regress)[ids].astype(np.int64)   # (N, 2)
            N = pts.shape[0]
            flat_pts = pts[:, 0] * W + pts[:, 1]
            pidx = reg_base + ch_reg * HW + flat_pts.reshape(N, 1, 1)   # (N, 2, 7)
            rg_idx.append(pidx.reshape(N * 2, 7))
            arow = np.transpose(anchor_np[:, :, pts[:, 0], pts[:, 1]],
                                (2, 0, 1)).reshape(N * 2, 7).astype(np.float32)
            refr = np.tile(ref_box.reshape(1, 7).astype(np.float32), (N * 2, 1))
            # exact target offsets (matches the PyTorch math, incl. atan2 wrap)
            tgt = np.empty((N * 2, 7), np.float32)
            tgt[:, 0:2] = (refr[:, 0:2] - arow[:, 0:2]) / np.sqrt(arow[:, 3:4] ** 2 +
                                                                  arow[:, 4:5] ** 2)
            tgt[:, 2:3] = (refr[:, 2:3] - arow[:, 2:3]) / arow[:, 5:6]
            tgt[:, 3:6] = np.log(refr[:, 3:6] / arow[:, 3:6])
            tdiff = refr[:, 6] - arow[:, 6]
            tgt[:, 6] = np.arctan2(np.sin(tdiff), np.cos(tdiff))
            rg_tgt.append(tgt)
            # 3.0 regression scale folded into the per-row weight
            rg_wt.append(np.full(N * 2, 3.0 / (N * 2 * 7), np.float32))

    # -------- classification packing: lane-dense (2, MC) idx + (6, MC) host ----
    i0 = np.concatenate(ce_i0)
    i1 = np.concatenate(ce_i1)
    sg = np.concatenate(ce_sg)
    wt = np.concatenate(ce_wt)
    MC = _bucket(i0.shape[0])
    padc = MC - i0.shape[0]
    i0 = np.concatenate([i0, np.zeros(padc, np.int64)])
    i1 = np.concatenate([i1, np.zeros(padc, np.int64)])
    sg = np.concatenate([sg, np.ones(padc, np.float32)])
    wt = np.concatenate([wt, np.zeros(padc, np.float32)])
    ce_idx = np.stack([i0, i1], 0).astype(np.int32)               # (2, MC)
    cls_host = np.zeros((6, MC), np.float32)                      # rows 2..7 of cls tile
    cls_host[0] = sg
    cls_host[1] = wt

    # -------- regression packing: lane-dense (7, MR) idx + (8, MR) target ------
    if rg_idx:
        p_idx = np.concatenate(rg_idx, 0)
        t_rows = np.concatenate(rg_tgt, 0)
        r_wt = np.concatenate(rg_wt, 0)
    else:
        p_idx = np.zeros((0, 7), np.int64)
        t_rows = np.zeros((0, 7), np.float32)
        r_wt = np.zeros((0,), np.float32)
    MR = _bucket(p_idx.shape[0])
    padr = MR - p_idx.shape[0]
    p_idx = np.concatenate([p_idx, np.zeros((padr, 7), np.int64)], 0)
    t_rows = np.concatenate([t_rows, np.zeros((padr, 7), np.float32)], 0)
    r_wt = np.concatenate([r_wt, np.zeros(padr, np.float32)], 0)
    pred_idx = np.ascontiguousarray(p_idx.T).astype(np.int32)     # (7, MR)
    rw_row = r_wt.reshape(1, MR).astype(np.float32)               # (1, MR)
    tgt_tile = np.ascontiguousarray(
        np.concatenate([t_rows.T, rw_row], 0)).astype(np.float32)  # (8, MR)

    return _device_loss(predicted_class_feature_batch, predicted_regress_feature_batch,
                        ce_idx, cls_host, pred_idx, rw_row, tgt_tile)


# ----------------------------------------------------------------------------- #
# Demo
# ----------------------------------------------------------------------------- #
if __name__ == "__main__":
    B, max_num = 2, 3
    H = W = int(700 / 4)      # 175, dictated by the anchor grid

    key = jax.random.PRNGKey(0)
    k1, k2, k3, k4 = jax.random.split(key, 4)

    u = jax.random.uniform(k1, (B, max_num, 7), jnp.float32)
    reference_bboxes_batch = jnp.stack([
        10.0 + 50.0 * u[..., 0],      # x in [10, 60)
        -25.0 + 50.0 * u[..., 1],     # y in [-25, 25)
        -5.0 + 1.0 * u[..., 2],       # z
        3.0 + 1.5 * u[..., 3],        # l > 0
        1.5 + 0.5 * u[..., 4],        # w > 0
        1.2 + 0.6 * u[..., 5],        # h > 0
        -1.5 + 3.0 * u[..., 6],       # ori
    ], axis=-1)
    num_ref_bbox_batch = jnp.array([2, 3], dtype=jnp.int32)

    predicted_class_feature_batch = jax.random.normal(k2, (B, 4, H, W), jnp.float32)
    predicted_regress_feature_batch = 0.1 * jax.random.normal(k3, (B, 14, H, W), jnp.float32)
    pred_bbox_f = jax.random.normal(k4, (B, 14, H, W), jnp.float32)

    anchor_set = get_anchor_bbox_feature()   # (2, 7, 175, 175), built in-script

    total_loss = loss_total_forward(reference_bboxes_batch, num_ref_bbox_batch,
                                    predicted_class_feature_batch,
                                    predicted_regress_feature_batch,
                                    pred_bbox_f, anchor_set, regress_type=0, seed=0)
    total_loss = jax.block_until_ready(total_loss)
    assert total_loss.shape == (1,) and bool(jnp.isfinite(total_loss[0]))
    print("KERNEL_OK")
</pallas_src>

<mosaic_0001>
module attributes {stable_mosaic.version = 11 : i64} {
  func.func @_loss_kernel(%arg0: memref<8x640xf32, #tpu.memory_space<vmem>>, %arg1: memref<8x128xf32, #tpu.memory_space<vmem>>, %arg2: memref<8x128xf32, #tpu.memory_space<vmem>>, %arg3: memref<1x1xf32, #tpu.memory_space<smem>>) attributes {dimension_semantics = [], scalar_prefetch = 0 : i64, scratch_operands = 0 : i64, tpu.core_type = #tpu.core_type<tc>} {
    %c0 = arith.constant 0 : index
    %c0_0 = arith.constant 0 : index
    %0 = vector.load %arg0[%c0, %c0_0] : memref<8x640xf32, #tpu.memory_space<vmem>>, vector<8x640xf32>
    %1 = vector.extract_strided_slice %0 {offsets = [2, 0], sizes = [1, 640], strides = [1, 1]} : vector<8x640xf32> to vector<1x640xf32>
    %2 = vector.extract_strided_slice %0 {offsets = [1, 0], sizes = [1, 640], strides = [1, 1]} : vector<8x640xf32> to vector<1x640xf32>
    %3 = vector.extract_strided_slice %0 {offsets = [0, 0], sizes = [1, 640], strides = [1, 1]} : vector<8x640xf32> to vector<1x640xf32>
    %4 = arith.subf %2, %3 : vector<1x640xf32>
    %5 = arith.mulf %1, %4 : vector<1x640xf32>
    %cst = arith.constant 0.000000e+00 : f32
    %6 = vector.broadcast %cst : f32 to vector<1x640xf32>
    %7 = arith.maximumf %5, %6 : vector<1x640xf32>
    %8 = math.absf %5 : vector<1x640xf32>
    %cst_1 = arith.constant 0.000000e+00 : f32
    %9 = vector.broadcast %cst_1 : f32 to vector<1x640xf32>
    %10 = arith.subf %9, %8 : vector<1x640xf32>
    %11 = math.exp %10 : vector<1x640xf32>
    %cst_2 = arith.constant 1.000000e+00 : f32
    %12 = vector.broadcast %cst_2 : f32 to vector<1x640xf32>
    %13 = arith.addf %12, %11 : vector<1x640xf32>
    %14 = math.log %13 : vector<1x640xf32>
    %15 = arith.addf %7, %14 : vector<1x640xf32>
    %16 = vector.extract_strided_slice %0 {offsets = [3, 0], sizes = [1, 640], strides = [1, 1]} : vector<8x640xf32> to vector<1x640xf32>
    %cst_3 = arith.constant 0.000000e+00 : f32
    %17 = vector.broadcast %cst_3 : f32 to vector<1x640xf32>
    %18 = arith.cmpf ogt, %16, %17 : vector<1x640xf32>
    %19 = arith.mulf %16, %15 : vector<1x640xf32>
    %cst_4 = arith.constant 0.000000e+00 : f32
    %20 = vector.broadcast %cst_4 : f32 to vector<1x640xf32>
    %21 = arith.select %18, %19, %20 : vector<1x640xi1>, vector<1x640xf32>
    %22 = vector.shape_cast %21 : vector<1x640xf32> to vector<1x1x640xf32>
    %cst_5 = arith.constant dense<0.000000e+00> : vector<1xf32>
    %23 = vector.multi_reduction <add>, %22, %cst_5 [1, 2] : vector<1x1x640xf32> to vector<1xf32>
    %24 = vector.shape_cast %23 : vector<1xf32> to vector<1x1x1xf32>
    %25 = vector.extract %24[0, 0, 0] : f32 from vector<1x1x1xf32>
    %c0_6 = arith.constant 0 : index
    %c0_7 = arith.constant 0 : index
    %26 = vector.load %arg1[%c0_6, %c0_7] : memref<8x128xf32, #tpu.memory_space<vmem>>, vector<8x128xf32>
    %c0_8 = arith.constant 0 : index
    %c0_9 = arith.constant 0 : index
    %27 = vector.load %arg2[%c0_8, %c0_9] : memref<8x128xf32, #tpu.memory_space<vmem>>, vector<8x128xf32>
    %28 = arith.subf %26, %27 : vector<8x128xf32>
    %29 = math.absf %28 : vector<8x128xf32>
    %cst_10 = arith.constant 1.000000e+00 : f32
    %30 = vector.broadcast %cst_10 : f32 to vector<8x128xf32>
    %31 = arith.cmpf olt, %29, %30 : vector<8x128xf32>
    %cst_11 = arith.constant 5.000000e-01 : f32
    %32 = vector.broadcast %cst_11 : f32 to vector<8x128xf32>
    %33 = arith.mulf %32, %28 : vector<8x128xf32>
    %34 = arith.mulf %33, %28 : vector<8x128xf32>
    %cst_12 = arith.constant 5.000000e-01 : f32
    %35 = vector.broadcast %cst_12 : f32 to vector<8x128xf32>
    %36 = arith.subf %29, %35 : vector<8x128xf32>
    %37 = arith.select %31, %34, %36 : vector<8x128xi1>, vector<8x128xf32>
    %cst_13 = arith.constant dense<0.000000e+00> : vector<128xf32>
    %38 = vector.multi_reduction <add>, %37, %cst_13 [0] : vector<8x128xf32> to vector<128xf32>
    %39 = vector.shape_cast %38 : vector<128xf32> to vector<1x128xf32>
    %c7 = arith.constant 7 : index
    %c0_14 = arith.constant 0 : index
    %40 = vector.load %arg1[%c7, %c0_14] : memref<8x128xf32, #tpu.memory_space<vmem>>, vector<1x128xf32>
    %cst_15 = arith.constant 0.000000e+00 : f32
    %41 = vector.broadcast %cst_15 : f32 to vector<1x128xf32>
    %42 = arith.cmpf ogt, %40, %41 : vector<1x128xf32>
    %43 = arith.mulf %40, %39 : vector<1x128xf32>
    %cst_16 = arith.constant 0.000000e+00 : f32
    %44 = vector.broadcast %cst_16 : f32 to vector<1x128xf32>
    %45 = arith.select %42, %43, %44 : vector<1x128xi1>, vector<1x128xf32>
    %46 = vector.shape_cast %45 : vector<1x128xf32> to vector<1x1x128xf32>
    %cst_17 = arith.constant dense<0.000000e+00> : vector<1xf32>
    %47 = vector.multi_reduction <add>, %46, %cst_17 [1, 2] : vector<1x1x128xf32> to vector<1xf32>
    %48 = vector.shape_cast %47 : vector<1xf32> to vector<1x1x1xf32>
    %49 = vector.extract %48[0, 0, 0] : f32 from vector<1x1x1xf32>
    %50 = arith.addf %25, %49 : f32
    %c0_18 = arith.constant 0 : index
    %c0_19 = arith.constant 0 : index
    %51 = memref.load %arg3[%c0_18, %c0_19] : memref<1x1xf32, #tpu.memory_space<smem>>
    memref.store %50, %arg3[%c0_18, %c0_19] : memref<1x1xf32, #tpu.memory_space<smem>>
    return
  }
}

</mosaic_0001>

<llo_original>
// kernel: _device_loss.1
$region0: #{_device_loss.1}
  #allocation0 [shape = 'u32[]', space=smem, size = 0x4, offset = 0x4, fixed_abs, tag = 'smem constant byte address 0x4 - core index']
  #allocation1 [shape = 'u32[72,128]{1,0:T(1,128)}', space=vmem, size = 0x9000, scoped, tag = 'internal scratch']
  %s0 = inlined_call_operand.vmem [shape: f32[8,640], index: 0, kind: input, shape index: {}]
  %s1 = inlined_call_operand.vmem [shape: f32[8,128], index: 1, kind: input, shape index: {}]
  %s2 = inlined_call_operand.vmem [shape: f32[8,128], index: 2, kind: input, shape index: {}]
  %s3 = inlined_call_operand.hbm [shape: f32[1,1], index: 3, kind: output, shape index: {}]
  %s4 = sld [smem:[#allocation0]]
  $region22: #{_device_loss.1} parent=0
    _
  %s6 = ssub.s32 1, %s4
  %s7 = scalar_select 0, %s6, %s4
  $region1: #{_device_loss.1} parent=0
    #allocation2 [shape = 'u8[512]{0}', space=smem, size = 0x200, scoped, tag = 'output window, operand 0, single buffered']
    #allocation3 [shape = 's32[1]{0}', space=sflag, size = 0x4, scoped, tag = 'scoped memory for _device_loss.1']
    %8 = vsyncpa [#allocation3], 0
    // Predicated region
    $region2: #{_device_loss.1} parent=1 // pred_check
      _
    $region3: #{_device_loss.1} parent=1 // pred_check_branch
      %10 = sbr.rel (0) target = $region5
    $region4: #{_device_loss.1} parent=1 // pred_region
      _
    $region5: #{_device_loss.1} parent=1 // pred_fallthru
      _
    // Predicated region
    $region6: #{_device_loss.1} parent=1 // pred_check
      _
    $region7: #{_device_loss.1} parent=1 // pred_check_branch
      %12 = sbr.rel (0) target = $region9
    $region8: #{_device_loss.1} parent=1 // pred_region
      _
    $region9: #{_device_loss.1} parent=1 // pred_fallthru
      _
    // Predicated region
    $region10: #{_device_loss.1} parent=1 // pred_check
      _
    $region11: #{_device_loss.1} parent=1 // pred_check_branch
      %14 = sbr.rel (0) target = $region13
    $region12: #{_device_loss.1} parent=1 // pred_region
      _
    $region13: #{_device_loss.1} parent=1 // pred_fallthru
      _
    %v15 = vld [vmem:[%s0] sm:$0xff]
    %v16 = vld [vmem:[%s0 + $0x8] sm:$0xff]
    %v17 = vld [vmem:[%s0 + $0x10] sm:$0xff]
    %v18 = vld [vmem:[%s0 + $0x18] sm:$0xff]
    %v19 = vld [vmem:[%s0 + $0x20] sm:$0xff]
    %v25 = vrot.slane %v15, 7
    %v26 = vrot.slane %v16, 7
    %v27 = vrot.slane %v17, 7
    %v28 = vrot.slane %v18, 7
    %v29 = vrot.slane %v19, 7
    %v35 = vsub.f32 %v15, %v25
    %v36 = vsub.f32 %v16, %v26
    %v37 = vsub.f32 %v17, %v27
    %v38 = vsub.f32 %v18, %v28
    %v39 = vsub.f32 %v19, %v29
    %v45 = vrot.slane %v35, 7
    %v46 = vrot.slane %v36, 7
    %v47 = vrot.slane %v37, 7
    %v48 = vrot.slane %v38, 7
    %v49 = vrot.slane %v39, 7
    %v55 = vmul.f32 %v15, %v45
    %v56 = vmul.f32 %v16, %v46
    %v57 = vmul.f32 %v17, %v47
    %v58 = vmul.f32 %v18, %v48
    %v59 = vmul.f32 %v19, %v49
    %v60 = vmax.f32 %v55, 0.0
    %v61 = vmax.f32 %v56, 0.0
    %v62 = vmax.f32 %v57, 0.0
    %v63 = vmax.f32 %v58, 0.0
    %v64 = vmax.f32 %v59, 0.0
    %v65 = vand.u32 2147483647, %v55
    %v66 = vand.u32 2147483647, %v56
    %v67 = vand.u32 2147483647, %v57
    %v68 = vand.u32 2147483647, %v58
    %v69 = vand.u32 2147483647, %v59
    %v70 = vsub.f32 0.0, %v65
    %v71 = vsub.f32 0.0, %v66
    %v72 = vsub.f32 0.0, %v67
    %v73 = vsub.f32 0.0, %v68
    %v74 = vsub.f32 0.0, %v69
    %v75 = vmul.f32 %v70, 1.442695
    %v76 = vpow.pop %v75
    %v77 = vmul.f32 %v71, 1.442695
    %v78 = vpow.pop %v77
    %v79 = vmul.f32 %v72, 1.442695
    %v80 = vpow.pop %v79
    %v81 = vmul.f32 %v73, 1.442695
    %v82 = vpow.pop %v81
    %v83 = vmul.f32 %v74, 1.442695
    %v84 = vpow.pop %v83
    %v85 = vadd.f32 %v76, 1.0
    %v86 = vadd.f32 %v78, 1.0
    %v87 = vadd.f32 %v80, 1.0
    %v88 = vadd.f32 %v82, 1.0
    %v89 = vadd.f32 %v84, 1.0
    %v90 = vlog2.pop %v85
    %v91 = vmul.f32 %v90, 0.6931472
    %v92 = vlog2.pop %v86
    %v93 = vmul.f32 %v92, 0.6931472
    %v94 = vlog2.pop %v87
    %v95 = vmul.f32 %v94, 0.6931472
    %v96 = vlog2.pop %v88
    %v97 = vmul.f32 %v96, 0.6931472
    %v98 = vlog2.pop %v89
    %v99 = vmul.f32 %v98, 0.6931472
    %v100 = vadd.f32 %v60, %v91
    %v101 = vadd.f32 %v61, %v93
    %v102 = vadd.f32 %v62, %v95
    %v103 = vadd.f32 %v63, %v97
    %v104 = vadd.f32 %v64, %v99
    %vm105 = vcmp.gt.f32.partialorder %v15, 0.0
    %vm106 = vcmp.gt.f32.partialorder %v16, 0.0
    %vm107 = vcmp.gt.f32.partialorder %v17, 0.0
    %vm108 = vcmp.gt.f32.partialorder %v18, 0.0
    %vm109 = vcmp.gt.f32.partialorder %v19, 0.0
    %v115 = vrot.slane %v100, 7
    %v116 = vrot.slane %v101, 7
    %v117 = vrot.slane %v102, 7
    %v118 = vrot.slane %v103, 7
    %v119 = vrot.slane %v104, 7
    %v125 = vmul.f32 %v15, %v115
    %v126 = vmul.f32 %v16, %v116
    %v127 = vmul.f32 %v17, %v117
    %v128 = vmul.f32 %v18, %v118
    %v129 = vmul.f32 %v19, %v119
    %v130 = vsel %vm105, %v125, 0.0
    %v131 = vsel %vm106, %v126, 0.0
    %v132 = vsel %vm107, %v127, 0.0
    %v133 = vsel %vm108, %v128, 0.0
    %v134 = vsel %vm109, %v129, 0.0
    %v140 = vrot.slane %v130, 3
    %v141 = vrot.slane %v131, 3
    %v142 = vrot.slane %v132, 3
    %v143 = vrot.slane %v133, 3
    %v144 = vrot.slane %v134, 3
    %vm150 = vcmask 1040384
    %v151 = vsel %vm150, %v140, 0.0
    %v152 = vsel %vm150, %v141, 0.0
    %v153 = vadd.f32 %v151, %v152
    %v154 = vsel %vm150, %v142, 0.0
    %v155 = vadd.f32 %v153, %v154
    %v156 = vsel %vm150, %v143, 0.0
    %v157 = vadd.f32 %v155, %v156
    %v158 = vsel %vm150, %v144, 0.0
    %v159 = vadd.f32 %v157, %v158
    %160 = vadd.xlane.f32.xlu0 %v159
    %v161 = vpop.xlane.xlu0 %160
    %v162 = vrot.slane %v161, 4
    %v163 = vadd.f32 %v161, %v162
    %v164 = vrot.slane %v163, 2
    %v165 = vadd.f32 %v163, %v164
    %v166 = vrot.slane %v165, 1
    %v167 = vadd.f32 %v165, %v166
    %s168 = vtos %v167
    %v169 = vld [vmem:[%s1] sm:$0xff]
    %v170 = vld [vmem:[%s2] sm:$0xff]
    %v171 = vsub.f32 %v169, %v170
    %v172 = vand.u32 2147483647, %v171
    %vm173 = vcmp.lt.f32.partialorder %v172, 1.0
    %v174 = vmul.f32 %v171, 0.5
    %v175 = vmul.f32 %v174, %v171
    %v176 = vsub.f32 %v172, 0.5
    %v177 = vsel %vm173, %v175, %v176
    %v178 = vrot.slane %v177, 4
    %v179 = vadd.f32 %v177, %v178
    %v180 = vrot.slane %v179, 2
    %v181 = vadd.f32 %v179, %v180
    %v182 = vrot.slane %v181, 1
    %v183 = vadd.f32 %v181, %v182
    %v184 = vld [vmem:[%s1 + $0x7] sm:$0x1]
    %vm185 = vcmp.gt.f32.partialorder %v184, 0.0
    %v186 = vmul.f32 %v184, %v183
    %v187 = vsel %vm185, %v186, 0.0
    %v188 = vsel %vm150, %v187, 0.0
    %189 = vadd.xlane.f32.xlu0 %v188
    %v190 = vpop.xlane.xlu0 %189
    %v191 = vrot.slane %v190, 4
    %v192 = vadd.f32 %v190, %v191
    %v193 = vrot.slane %v192, 2
    %v194 = vadd.f32 %v192, %v193
    %v195 = vrot.slane %v194, 1
    %v196 = vadd.f32 %v194, %v195
    %s197 = vtos %v196
    %s198 = sadd.f32 %s168, %s197
    %s199 = scalar_lea.smem [#allocation2], 0
    %200 = sst [smem:[%s199]] %s198
    // Predicated region
    $region14: #{_device_loss.1} parent=1 // pred_check
      _
    $region15: #{_device_loss.1} parent=1 // pred_check_branch
      %202 = sbr.rel (0) target = $region17
    $region16: #{_device_loss.1} parent=1 // pred_region
      %204 = vsyncadd [#allocation3], 0
      %s206 = sshll.u32 %s3, 4
      %s207 = int_to_ptr.hbm [resolvable:$true] %s206
      %209 = dma.smem_to_hbm [#allocation2], 16, %s207, [#allocation3]
    $region17: #{_device_loss.1} parent=1 // pred_fallthru
      _
    // Predicated region
    $region18: #{_device_loss.1} parent=1 // pred_check
      _
    $region19: #{_device_loss.1} parent=1 // pred_check_branch
      %211 = sbr.rel (0) target = $region21
    $region20: #{_device_loss.1} parent=1 // pred_region
      %213 = dma.done [#allocation3], 16
    $region21: #{_device_loss.1} parent=1 // pred_fallthru
      _
    %214 = sfence
    %215 = vsyncpa [#allocation3], 1

</llo_original>
